<compile_context>
chip_gen: v5e
topology: v5e:2x2
jax: 0.10.0
libtpu: 0.0.40
codegen_flags: <defaults>
</compile_context>

<pallas_src>
import functools
import math

import jax
import jax.numpy as jnp
from jax import lax
from jax.experimental import pallas as pl
from jax.experimental.pallas import tpu as pltpu

_EPS = 1e-8                      # torch.nn.CosineSimilarity default eps
_EPS2 = _EPS * _EPS
_VMEM_LIMIT = 48 * 1024 * 1024   # > v5e default (16 MiB) / v6e-v7x default (32 MiB),
                                 # < v7x physical VMEM (64 MiB)
_VMEM_BUDGET = 20 * 1024 * 1024  # target usage for tiles + f32 temporaries


def _round_up(a, m):
    return ((a + m - 1) // m) * m


# ---------------------------------------------------------------------------
# Kernel bodies
# ---------------------------------------------------------------------------

def _cross_cos_kernel(x_ref, y_ref, o_ref, *, inv_temp):
    """out[i, j] = cos(x[i], y[j]) * inv_temp, one (tm, tn) MXU tile per grid step."""
    x = x_ref[...]                            # (tm, H), native dtype -> bf16 MXU if bf16 in
    y = y_ref[...]                            # (tn, H)
    xf = x.astype(jnp.float32)
    yf = y.astype(jnp.float32)
    cdims = (((1,), (1,)), ((), ()))          # contract the feature axis of both operands
    # <x_i, y_j> on the MXU, f32 accumulation.
    w12 = lax.dot_general(x, y, cdims, preferred_element_type=jnp.float32)      # (tm, tn)
    # |x_i|^2 as a sublane column; |y_j|^2 as a lane row (ones-vector matmul so it is
    # produced lane-major with no relayout / transpose).
    w11 = jnp.sum(xf * xf, axis=-1, keepdims=True)                              # (tm, 1)
    ones_row = jnp.ones((1, y.shape[-1]), jnp.float32)
    w22 = lax.dot_general(ones_row, yf * yf, cdims,
                          preferred_element_type=jnp.float32)                   # (1, tn)
    denom = jnp.maximum(w11 * w22, _EPS2)                                       # (tm, tn)
    o_ref[...] = (w12 * lax.rsqrt(denom) * inv_temp).astype(o_ref.dtype)


def _rowwise_cos_kernel(x_ref, y_ref, o_ref, *, inv_temp):
    """out[r] = cos(x[r], y[r]) * inv_temp for one block of rows."""
    xf = x_ref[...].astype(jnp.float32)       # (bn, H)
    yf = y_ref[...].astype(jnp.float32)
    h = xf.shape[-1]
    ones_row = jnp.ones((1, h), jnp.float32)
    cdims = (((1,), (1,)), ((), ()))
    # Per-row reductions on the (otherwise idle) MXU: the results land lane-major, so the
    # block output is a lane-dense (1, bn) row instead of a (bn, 1) column.
    w12 = lax.dot_general(ones_row, xf * yf, cdims, preferred_element_type=jnp.float32)
    w11 = lax.dot_general(ones_row, xf * xf, cdims, preferred_element_type=jnp.float32)
    w22 = lax.dot_general(ones_row, yf * yf, cdims, preferred_element_type=jnp.float32)
    cos = w12 * lax.rsqrt(jnp.maximum(w11 * w22, _EPS2))                         # (1, bn)
    o_ref[...] = (cos * inv_temp).astype(o_ref.dtype)[None]                      # (1, 1, bn)


# ---------------------------------------------------------------------------
# Tile selection (sized for v5e/v6e/v7x VMEM; keeps TPU (8,128) tiling rules)
# ---------------------------------------------------------------------------

def _pick_row_block(n, h, itemsize):
    bytes_per_row = h * (4 * itemsize + 24)          # 2 inputs x 2 buffers + ~6 f32 temps
    cap = max(8, min(2048, (_VMEM_BUDGET // bytes_per_row) // 8 * 8))
    if n <= 8:
        return n                                      # block == full array dim (legal)
    # Aim for >= 2 grid steps so both v7x TensorCores stay busy on big problems.
    return min(cap, _round_up(pl.cdiv(n, 2), 8))


def _pick_cross_tiles(b1, b2, h, itemsize):
    tm = b1 if b1 <= 256 else 256
    tn = b2 if b2 <= 256 else 256

    def vmem_bytes(a, b):
        ins = 2 * (a + b) * h * itemsize      # double-buffered input tiles
        tmps = (a + b) * h * 8                # f32 upcasts + squared copies
        outs = a * b * 4 * 4                  # f32 out tile (double buffered) + temps
        return ins + tmps + outs

    while vmem_bytes(tm, tn) > _VMEM_BUDGET:
        if tn >= 256 and b2 > tn:             # stays a multiple of 128
            tn //= 2
        elif tm >= 16 and tm % 8 == 0:
            tm = max(8, (tm // 2) // 8 * 8)
        else:
            break  # TODO(synk): also tile the feature axis for extremely large H
    return tm, tn


# ---------------------------------------------------------------------------
# pallas_call wrappers
# ---------------------------------------------------------------------------

def _cross_similarity(x2, y2, inv_temp, out_dtype):
    b1, h = x2.shape
    b2 = y2.shape[0]
    itemsize = max(x2.dtype.itemsize, y2.dtype.itemsize)
    tm, tn = _pick_cross_tiles(b1, b2, h, itemsize)
    kernel = functools.partial(_cross_cos_kernel, inv_temp=inv_temp)
    return pl.pallas_call(
        kernel,
        out_shape=jax.ShapeDtypeStruct((b1, b2), out_dtype),
        grid_spec=pltpu.PrefetchScalarGridSpec(
            num_scalar_prefetch=0,
            grid=(pl.cdiv(b1, tm), pl.cdiv(b2, tn)),
            in_specs=[
                pl.BlockSpec((tm, h), lambda i, j: (i, 0)),
                pl.BlockSpec((tn, h), lambda i, j: (j, 0)),
            ],
            out_specs=pl.BlockSpec((tm, tn), lambda i, j: (i, j)),
        ),
        compiler_params=pltpu.CompilerParams(
            dimension_semantics=("parallel", "parallel"),
            vmem_limit_bytes=_VMEM_LIMIT,
        ),
    )(x2, y2)


def _rowwise_similarity(x2, y2, inv_temp, out_dtype):
    n, h = x2.shape
    itemsize = max(x2.dtype.itemsize, y2.dtype.itemsize)
    bn = _pick_row_block(n, h, itemsize)
    nb = pl.cdiv(n, bn)                       # masked tail block: no full-array jnp.pad
    kernel = functools.partial(_rowwise_cos_kernel, inv_temp=inv_temp)
    out = pl.pallas_call(
        kernel,
        out_shape=jax.ShapeDtypeStruct((nb, 1, bn), out_dtype),
        grid_spec=pltpu.PrefetchScalarGridSpec(
            num_scalar_prefetch=0,
            grid=(nb,),
            in_specs=[
                pl.BlockSpec((bn, h), lambda i: (i, 0)),
                pl.BlockSpec((bn, h), lambda i: (i, 0)),
            ],
            out_specs=pl.BlockSpec((1, 1, bn), lambda i: (i, 0, 0)),
        ),
        compiler_params=pltpu.CompilerParams(
            dimension_semantics=("parallel",),
            vmem_limit_bytes=_VMEM_LIMIT,
        ),
    )(x2, y2)
    return out.reshape(-1)[:n]


# ---------------------------------------------------------------------------
# Public wrapper (matches Similarity.forward semantics)
# ---------------------------------------------------------------------------

def similarity(x, y, temp):
    """Pallas equivalent of Similarity.forward: cosine_similarity(x, y, dim=-1) / temp."""
    assert x.shape[-1] == y.shape[-1], "feature (last) dims must match"
    h = x.shape[-1]
    nd = max(x.ndim, y.ndim)
    xs = x.reshape((1,) * (nd - x.ndim) + x.shape)
    ys = y.reshape((1,) * (nd - y.ndim) + y.shape)
    bx, by = xs.shape[:-1], ys.shape[:-1]
    out_batch = tuple(jnp.broadcast_shapes(bx, by))
    out_dtype = jnp.promote_types(x.dtype, y.dtype)
    # temp is a static hyper-parameter (module __init__ arg), so baking it in is fine.
    # TODO(synk): pass it as an SMEM scalar if it ever needs to be a traced value.
    inv_temp = float(1.0 / temp)

    # --- outer-product ("SimCSE") dispatch: no batch axis shared by both operands ---
    if all(a == 1 or b == 1 for a, b in zip(bx, by)):
        x_axes = [i for i in range(nd - 1) if by[i] == 1]   # axes owned by x (or both 1)
        y_axes = [i for i in range(nd - 1) if by[i] != 1]   # axes owned by y
        b1 = math.prod(bx)
        b2 = math.prod(by)
        x2 = xs.reshape(b1, h)
        y2 = ys.reshape(b2, h)
        cross = _cross_similarity(x2, y2, inv_temp, out_dtype)           # (b1, b2)
        order = x_axes + y_axes
        shaped = cross.reshape(tuple(bx[i] for i in x_axes) +
                               tuple(by[i] for i in y_axes))
        if len(order) > 1:
            perm = sorted(range(len(order)), key=lambda k: order[k])
            shaped = jnp.transpose(shaped, perm)
        return shaped.reshape(out_batch)

    # --- row-wise path: shapes share batch axes; broadcast (only if needed), flatten ---
    full = out_batch + (h,)
    xb = xs if xs.shape == full else jnp.broadcast_to(xs, full)
    yb = ys if ys.shape == full else jnp.broadcast_to(ys, full)
    # TODO(synk): mixed shared+broadcast batch axes still materialize the broadcast.
    n = math.prod(out_batch)
    flat = _rowwise_similarity(xb.reshape(n, h), yb.reshape(n, h), inv_temp, out_dtype)
    return flat.reshape(out_batch)


# ---------------------------------------------------------------------------
# Pure-JAX reference (torch cosine_similarity semantics)
# ---------------------------------------------------------------------------

def _reference(x, y, temp):
    shape = jnp.broadcast_shapes(x.shape, y.shape)
    xb = jnp.broadcast_to(x, shape).astype(jnp.float32)
    yb = jnp.broadcast_to(y, shape).astype(jnp.float32)
    w12 = jnp.sum(xb * yb, axis=-1)
    w11 = jnp.sum(xb * xb, axis=-1)
    w22 = jnp.sum(yb * yb, axis=-1)
    return w12 / jnp.sqrt(jnp.maximum(w11 * w22, _EPS2)) / temp


if __name__ == "__main__":
    key = jax.random.PRNGKey(0)
    k1, k2, k3, k4, k5 = jax.random.split(key, 5)
    temp = 0.05
    B, H = 8, 32
    # Loose-ish tolerance: MXU f32 matmuls may use multi-pass bf16 accumulation.
    tol = dict(atol=3e-2, rtol=3e-2)

    # 1) SimCSE-style cross similarity: (B,1,H) x (1,B,H) -> (B,B) via the MXU path.
    x1 = jax.random.normal(k1, (B, 1, H), dtype=jnp.float32)
    y1 = jax.random.normal(k2, (1, B, H), dtype=jnp.float32)
    o1 = jax.block_until_ready(similarity(x1, y1, temp))
    assert o1.shape == (B, B)
    assert jnp.allclose(o1, _reference(x1, y1, temp), **tol), "cross path mismatch"

    # 2) element-wise (same-shape) path: (2,8,H) x (2,8,H) -> (2,8).
    x2 = jax.random.normal(k3, (2, 8, H), dtype=jnp.float32)
    y2 = jax.random.normal(k4, (2, 8, H), dtype=jnp.float32)
    o2 = jax.block_until_ready(similarity(x2, y2, temp))
    assert o2.shape == (2, 8)
    assert jnp.allclose(o2, _reference(x2, y2, temp), **tol), "row-wise path mismatch"

    # 3) single vector vs batch: (H,) x (B,H) -> (B,).
    x3 = jax.random.normal(k5, (H,), dtype=jnp.float32)
    y3 = y1[0]                                  # (B, H)
    o3 = jax.block_until_ready(similarity(x3, y3, temp))
    assert o3.shape == (B,)
    assert jnp.allclose(o3, _reference(x3, y3, temp), **tol), "broadcast path mismatch"

    print("KERNEL_OK")
</pallas_src>

<mosaic_0001>
module attributes {stable_mosaic.version = 11 : i64} {
  func.func @_cross_cos_kernel(%arg0: i32, %arg1: i32, %arg2: memref<8x32xf32, #tpu.memory_space<vmem>>, %arg3: memref<8x32xf32, #tpu.memory_space<vmem>>, %arg4: memref<8x8xf32, #tpu.memory_space<vmem>>) attributes {dimension_semantics = [#tpu.dimension_semantics<parallel>, #tpu.dimension_semantics<parallel>], iteration_bounds = array<i64: 1, 1>, scalar_prefetch = 0 : i64, scratch_operands = 0 : i64, tpu.core_type = #tpu.core_type<tc>, window_params = [{transform_indices = @transform_0, window_bounds = array<i64: 8, 32>}, {transform_indices = @transform_1, window_bounds = array<i64: 8, 32>}, {transform_indices = @transform_2, window_bounds = array<i64: 8, 8>}]} {
    %c0 = arith.constant 0 : index
    %c0_0 = arith.constant 0 : index
    %0 = vector.load %arg2[%c0, %c0_0] : memref<8x32xf32, #tpu.memory_space<vmem>>, vector<8x32xf32>
    %c0_1 = arith.constant 0 : index
    %c0_2 = arith.constant 0 : index
    %1 = vector.load %arg3[%c0_1, %c0_2] : memref<8x32xf32, #tpu.memory_space<vmem>>, vector<8x32xf32>
    %cst = arith.constant dense<0.000000e+00> : vector<8x8xf32>
    %2 = tpu.matmul %0, %1, %cst {dimension_numbers = #tpu.dot_dimension_numbers<[1], [1], [0], [0], [0, 0, 1, 0], [], []>} : vector<8x32xf32>, vector<8x32xf32>, vector<8x8xf32> -> vector<8x8xf32>
    %3 = arith.mulf %0, %0 : vector<8x32xf32>
    %cst_3 = arith.constant dense<0.000000e+00> : vector<8xf32>
    %4 = vector.multi_reduction <add>, %3, %cst_3 [1] : vector<8x32xf32> to vector<8xf32>
    %5 = vector.shape_cast %4 : vector<8xf32> to vector<8x1xf32>
    %cst_4 = arith.constant 1.000000e+00 : f32
    %6 = vector.broadcast %cst_4 : f32 to vector<1x32xf32>
    %7 = arith.mulf %1, %1 : vector<8x32xf32>
    %cst_5 = arith.constant dense<0.000000e+00> : vector<1x8xf32>
    %8 = tpu.matmul %6, %7, %cst_5 {dimension_numbers = #tpu.dot_dimension_numbers<[1], [1], [0], [0], [0, 0, 1, 0], [], []>} : vector<1x32xf32>, vector<8x32xf32>, vector<1x8xf32> -> vector<1x8xf32>
    %9 = vector.broadcast %5 : vector<8x1xf32> to vector<8x8xf32>
    %10 = vector.broadcast %8 : vector<1x8xf32> to vector<8x8xf32>
    %11 = arith.mulf %9, %10 : vector<8x8xf32>
    %cst_6 = arith.constant 1.000000e-16 : f32
    %12 = vector.broadcast %cst_6 : f32 to vector<8x8xf32>
    %13 = arith.maximumf %11, %12 : vector<8x8xf32>
    %14 = math.rsqrt %13 : vector<8x8xf32>
    %15 = arith.mulf %2, %14 : vector<8x8xf32>
    %cst_7 = arith.constant 2.000000e+01 : f32
    %16 = vector.broadcast %cst_7 : f32 to vector<8x8xf32>
    %17 = arith.mulf %15, %16 : vector<8x8xf32>
    %c0_8 = arith.constant 0 : index
    %c0_9 = arith.constant 0 : index
    %18 = vector.load %arg4[%c0_8, %c0_9] : memref<8x8xf32, #tpu.memory_space<vmem>>, vector<8x8xf32>
    tpu.vector_store %arg4[%c0_8, %c0_9], %17 {strides = array<i32>} : memref<8x8xf32, #tpu.memory_space<vmem>>, vector<8x8xf32>,
    return
  }
  func.func @transform_0(%arg0: i32, %arg1: i32) -> (i32, i32) {
    %c0_i32 = arith.constant 0 : i32
    %c0_i32_0 = arith.constant 0 : i32
    return %arg0, %c0_i32 : i32, i32
  }
  func.func @transform_1(%arg0: i32, %arg1: i32) -> (i32, i32) {
    %c0_i32 = arith.constant 0 : i32
    %c0_i32_0 = arith.constant 0 : i32
    return %arg1, %c0_i32 : i32, i32
  }
  func.func @transform_2(%arg0: i32, %arg1: i32) -> (i32, i32) {
    %c0_i32 = arith.constant 0 : i32
    return %arg0, %arg1 : i32, i32
  }
}

</mosaic_0001>

<llo_original>
// kernel: tpu_custom_call.1
$region0: #{tpu_custom_call.1}
  #allocation0 [shape = 'u32[]', space=smem, size = 0x4, offset = 0x4, fixed_abs, tag = 'smem constant byte address 0x4 - core index']
  #allocation1 [shape = 'u32[72,128]{1,0:T(1,128)}', space=vmem, size = 0x9000, scoped, tag = 'internal scratch']
  %s0 = inlined_call_operand.hbm [shape: f32[8,32], index: 0, kind: input, shape index: {}]
  %s1 = inlined_call_operand.hbm [shape: f32[8,32], index: 1, kind: input, shape index: {}]
  %s2 = inlined_call_operand.hbm [shape: f32[8,8], index: 2, kind: output, shape index: {}]
  %s3 = sld [smem:[#allocation0]]
  $region26: #{tpu_custom_call.1} parent=0
    _
  %s5 = ssub.s32 1, %s3
  %s6 = scalar_select 0, %s5, %s3
  $region1: #{tpu_custom_call.1} parent=0
    #allocation2 [shape = 'u8[4096]{0}', space=vmem, size = 0x1000, scoped, tag = 'input window, operand 0, single buffered']
    #allocation3 [shape = 's32[1]{0}', space=sflag, size = 0x4, scoped, tag = 'scoped memory for tpu_custom_call.1']
    #allocation4 [shape = 's32[1]{0}', space=sflag, size = 0x4, scoped, tag = 'scoped memory for tpu_custom_call.1']
    #allocation5 [shape = 'u8[4096]{0}', space=vmem, size = 0x1000, scoped, tag = 'input window, operand 1, single buffered']
    #allocation6 [shape = 's32[1]{0}', space=sflag, size = 0x4, scoped, tag = 'scoped memory for tpu_custom_call.1']
    #allocation7 [shape = 'u8[4096]{0}', space=vmem, size = 0x1000, scoped, tag = 'output window, operand 0, single buffered']
    %7 = vsyncpa [#allocation3], 0
    %8 = vsyncpa [#allocation6], 0
    %9 = vsyncpa [#allocation4], 0
    // Predicated region
    $region2: #{tpu_custom_call.1} parent=1 // pred_check
      _
    $region3: #{tpu_custom_call.1} parent=1 // pred_check_branch
      %11 = sbr.rel (0) target = $region5
    $region4: #{tpu_custom_call.1} parent=1 // pred_region
      %13 = vsyncadd [#allocation3], 0
      %s15 = sshll.u32 %s0, 4
      %s16 = int_to_ptr.hbm [resolvable:$true] %s15
      %s17 = sshll.u32 [#allocation2], 4
      %s18 = int_to_ptr.vmem [resolvable:$true] %s17
      %20 = dma.hbm_to_vmem [thread:$0]  %s16, 128, %s18, [#allocation3]
    $region5: #{tpu_custom_call.1} parent=1 // pred_fallthru
      _
    // Predicated region
    $region6: #{tpu_custom_call.1} parent=1 // pred_check
      _
    $region7: #{tpu_custom_call.1} parent=1 // pred_check_branch
      %22 = sbr.rel (0) target = $region9
    $region8: #{tpu_custom_call.1} parent=1 // pred_region
      %24 = vsyncadd [#allocation6], 0
      %s26 = sshll.u32 %s1, 4
      %s27 = int_to_ptr.hbm [resolvable:$true] %s26
      %s28 = sshll.u32 [#allocation5], 4
      %s29 = int_to_ptr.vmem [resolvable:$true] %s28
      %31 = dma.hbm_to_vmem [thread:$0]  %s27, 128, %s29, [#allocation6]
    $region9: #{tpu_custom_call.1} parent=1 // pred_fallthru
      _
    // Predicated region
    $region10: #{tpu_custom_call.1} parent=1 // pred_check
      _
    $region11: #{tpu_custom_call.1} parent=1 // pred_check_branch
      %33 = sbr.rel (0) target = $region13
    $region12: #{tpu_custom_call.1} parent=1 // pred_region
      %35 = dma.done [#allocation3], 128
    $region13: #{tpu_custom_call.1} parent=1 // pred_fallthru
      _
    // Predicated region
    $region14: #{tpu_custom_call.1} parent=1 // pred_check
      _
    $region15: #{tpu_custom_call.1} parent=1 // pred_check_branch
      %37 = sbr.rel (0) target = $region17
    $region16: #{tpu_custom_call.1} parent=1 // pred_region
      %39 = dma.done [#allocation6], 128
    $region17: #{tpu_custom_call.1} parent=1 // pred_fallthru
      _
    %v40 = vld [vmem:[#allocation2] sm:$0xff]
    %v41 = vld [vmem:[#allocation5] sm:$0xff]
    %vm42 = vcmask 261120
    %v44 = vsel %vm42, %v40, 0
    %v47 = vsel %vm42, %v41, 0
    %49 = vmatpush.xpose.msra.mxu0 0.0
    %50 = vmatpush.xpose.msra.mxu0 0.0
    %51 = vmatpush.xpose.msra.mxu0 0.0
    %52 = vmatpush.xpose.msra.mxu0 0.0
    %53 = vmatpush.xpose.msra.mxu0 0.0
    %54 = vmatpush.xpose.msra.mxu0 0.0
    %55 = vmatpush.xpose.msra.mxu0 0.0
    %56 = vmatpush.xpose.msra.mxu0 0.0
    %57 = vmatpush.xpose.msra.mxu0 0.0
    %58 = vmatpush.xpose.msra.mxu0 0.0
    %59 = vmatpush.xpose.msra.mxu0 0.0
    %60 = vmatpush.xpose.msra.mxu0 0.0
    %61 = vmatpush.xpose.msra.mxu0 0.0
    %62 = vmatpush.xpose.msra.mxu0 0.0
    %63 = vmatpush.xpose.msra.mxu0 0.0
    %64 = vmatpush.xpose.msra.mxu0 %v47
    %65 = vmatmul.f32.gmra.mxu0 %v44
    %v66 = vpop.f32.mrf.mxu0
    %v67 = vadd.f32 0.0, %v66
    %68 = vdwg.mxu0
    %v69 = vmul.f32 %v40, %v40
    %v70 = vsel %vm42, %v69, 0.0
    %71 = vadd.xlane.f32.xlu0 %v70
    %v72 = vpop.xlane.xlu0 %71
    %v73 = vmul.f32 %v41, %v41
    %v75 = vsel %vm42, 1.0, 0
    %v78 = vsel %vm42, %v73, 0
    %80 = vmatpush.xpose.msra.mxu0 0.0
    %81 = vmatpush.xpose.msra.mxu0 0.0
    %82 = vmatpush.xpose.msra.mxu0 0.0
    %83 = vmatpush.xpose.msra.mxu0 0.0
    %84 = vmatpush.xpose.msra.mxu0 0.0
    %85 = vmatpush.xpose.msra.mxu0 0.0
    %86 = vmatpush.xpose.msra.mxu0 0.0
    %87 = vmatpush.xpose.msra.mxu0 0.0
    %88 = vmatpush.xpose.msra.mxu0 0.0
    %89 = vmatpush.xpose.msra.mxu0 0.0
    %90 = vmatpush.xpose.msra.mxu0 0.0
    %91 = vmatpush.xpose.msra.mxu0 0.0
    %92 = vmatpush.xpose.msra.mxu0 0.0
    %93 = vmatpush.xpose.msra.mxu0 0.0
    %94 = vmatpush.xpose.msra.mxu0 0.0
    %95 = vmatpush.xpose.msra.mxu0 %v78
    %96 = vmatmul.f32.gmra.mxu0 %v75
    %v97 = vpop.f32.mrf.mxu0
    %v98 = vadd.f32 0.0, %v97
    %99 = vdwg.mxu0
    %v100 = vperm.slane %v98, 0
    %v101 = vmul.f32 %v72, %v100
    %v102 = vmax.f32 %v101, 1e-16
    %v103 = vrsqrt.pop %v102
    %v104 = vmul.f32 %v103, %v102
    %v105 = vmul.f32 %v104, %v103
    %v106 = vmul.f32 0.5, %v105
    %v107 = vsub.f32 1.5, %v106
    %v108 = vmul.f32 %v103, %v107
    %vm109 = vweird.f32 %v102
    %vm110 = vweird.f32 %v103
    %vm111 = vmor %vm109, %vm110
    %v112 = vsel %vm111, %v103, %v108
    %v113 = vmul.f32 %v67, %v112
    %v114 = vmul.f32 %v113, 20.0
    %vm115 = vcmask 64512
    %116 = vst.msk [vmem:[#allocation7] sm:$0xff] %vm115, %v114
    // Predicated region
    $region18: #{tpu_custom_call.1} parent=1 // pred_check
      _
    $region19: #{tpu_custom_call.1} parent=1 // pred_check_branch
      %118 = sbr.rel (0) target = $region21
    $region20: #{tpu_custom_call.1} parent=1 // pred_region
      %120 = vsyncadd [#allocation4], 0
      %s122 = sshll.u32 [#allocation7], 4
      %s123 = int_to_ptr.vmem [resolvable:$true] %s122
      %s124 = sshll.u32 %s2, 4
      %s125 = int_to_ptr.hbm [resolvable:$true] %s124
      %127 = dma.vmem_to_hbm [thread:$0]  %s123, 128, %s125, [#allocation4]
    $region21: #{tpu_custom_call.1} parent=1 // pred_fallthru
      _
    // Predicated region
    $region22: #{tpu_custom_call.1} parent=1 // pred_check
      _
    $region23: #{tpu_custom_call.1} parent=1 // pred_check_branch
      %129 = sbr.rel (0) target = $region25
    $region24: #{tpu_custom_call.1} parent=1 // pred_region
      %131 = dma.done [#allocation4], 128
    $region25: #{tpu_custom_call.1} parent=1 // pred_fallthru
      _
    %132 = vsyncpa [#allocation3], 1
    %133 = vsyncpa [#allocation6], 1
    %134 = vsyncpa [#allocation4], 1

</llo_original>
